<compile_context>
chip_gen: v5e
topology: v5e:2x2
jax: 0.10.0
libtpu: 0.0.40
codegen_flags: <defaults>
</compile_context>

<pallas_src>
import functools

import jax
import jax.numpy as jnp
from jax.experimental import pallas as pl
from jax.experimental.pallas import tpu as pltpu

OBS_DIM = 8       # LunarLander-v3 observation dim
ACT_DIM = 4       # LunarLander-v3 action dim
HIDDEN = 64       # logical hidden width (matches the PyTorch module)

HID_PAD = 128     # hidden width padded to a full lane vector
HEAD_PAD = 8      # fused actor(4)+critic(1) head, padded to 8 lanes
MAX_TILE_B = 2048  # batch tile for large PPO rollout batches

# Fixed batch buckets -> bounded number of Mosaic compile variants.
_BATCH_BUCKETS = (8, 128, 512, 1024, 2048)


def _choose_tiling(batch):
    """Return (bp, tile_b) from a small fixed bucket set (avoids recompiles)."""
    for b in _BATCH_BUCKETS:
        if batch <= b:
            return b, b                      # single grid step
    tile_b = MAX_TILE_B
    n_tiles = -(-batch // tile_b)            # ceil div
    if n_tiles % 2:                          # even grid -> balanced v7x megacore
        n_tiles += 1
    return n_tiles * tile_b, tile_b


def actor_critic_kernel(x_ref, w1_ref, b1_ref, w2_ref, b2_ref,
                        wh_ref, bh_ref, out_ref):
    # shared MLP: Linear -> Tanh -> Linear -> Tanh (lane-dense, 128 wide)
    x = x_ref[...]
    h1 = jnp.tanh(
        jnp.dot(x, w1_ref[...], preferred_element_type=jnp.float32) + b1_ref[...]
    )
    h2 = jnp.tanh(
        jnp.dot(h1, w2_ref[...], preferred_element_type=jnp.float32) + b2_ref[...]
    )
    # fused actor+critic head: one matmul, one narrow (8-lane) store
    out_ref[...] = (
        jnp.dot(h2, wh_ref[...], preferred_element_type=jnp.float32) + bh_ref[...]
    )


def pack_params(p):
    """Pack logical (in,out) params into the padded/fused kernel layout."""
    w1 = jnp.zeros((OBS_DIM, HID_PAD), jnp.float32).at[:, :HIDDEN].set(p["w1"])
    b1 = jnp.zeros((1, HID_PAD), jnp.float32).at[:, :HIDDEN].set(p["b1"])
    w2 = (jnp.zeros((HID_PAD, HID_PAD), jnp.float32)
          .at[:HIDDEN, :HIDDEN].set(p["w2"]))
    b2 = jnp.zeros((1, HID_PAD), jnp.float32).at[:, :HIDDEN].set(p["b2"])
    # fused heads: cols [0:ACT_DIM] = actor, col [ACT_DIM] = critic, rest 0
    wh = (jnp.zeros((HID_PAD, HEAD_PAD), jnp.float32)
          .at[:HIDDEN, :ACT_DIM].set(p["wa"])
          .at[:HIDDEN, ACT_DIM:ACT_DIM + 1].set(p["wc"]))
    bh = (jnp.zeros((1, HEAD_PAD), jnp.float32)
          .at[:, :ACT_DIM].set(p["ba"])
          .at[:, ACT_DIM:ACT_DIM + 1].set(p["bc"]))
    return dict(w1=w1, b1=b1, w2=w2, b2=b2, wh=wh, bh=bh)


@functools.partial(jax.jit, static_argnames=("tile_b",))
def _forward_padded(x_pad, packed, *, tile_b):
    bp = x_pad.shape[0]
    grid = (bp // tile_b,)

    return pl.pallas_call(
        actor_critic_kernel,
        grid_spec=pltpu.PrefetchScalarGridSpec(
            num_scalar_prefetch=0,
            grid=grid,
            in_specs=[
                pl.BlockSpec((tile_b, OBS_DIM), lambda i: (i, 0)),      # x tile
                pl.BlockSpec((OBS_DIM, HID_PAD), lambda i: (0, 0)),     # w1
                pl.BlockSpec((1, HID_PAD), lambda i: (0, 0)),           # b1
                pl.BlockSpec((HID_PAD, HID_PAD), lambda i: (0, 0)),     # w2
                pl.BlockSpec((1, HID_PAD), lambda i: (0, 0)),           # b2
                pl.BlockSpec((HID_PAD, HEAD_PAD), lambda i: (0, 0)),    # fused heads
                pl.BlockSpec((1, HEAD_PAD), lambda i: (0, 0)),          # fused bias
            ],
            out_specs=pl.BlockSpec((tile_b, HEAD_PAD), lambda i: (i, 0)),
        ),
        out_shape=jax.ShapeDtypeStruct((bp, HEAD_PAD), jnp.float32),
        compiler_params=pltpu.CompilerParams(
            dimension_semantics=("parallel",),   # v7x: shard batch over both TCs
        ),
    )(
        x_pad,
        packed["w1"], packed["b1"],
        packed["w2"], packed["b2"],
        packed["wh"], packed["bh"],
    )


def actor_critic_forward(x, packed_params):
    """x: (B, OBS_DIM) float32 -> (logits (B, ACT_DIM), value (B, 1))."""
    B = x.shape[0]
    bp, tile_b = _choose_tiling(B)
    if bp != B:
        x = jnp.pad(x, ((0, bp - B), (0, 0)))
    out = _forward_padded(x, packed_params, tile_b=tile_b)
    # Un-pad slices done outside jit against the narrow (bp, 8) slab, so the
    # jitted kernel never recompiles on the original batch size.
    logits = out[:B, :ACT_DIM]
    value = out[:B, ACT_DIM:ACT_DIM + 1]
    return logits, value


def init_params(key):
    """Deterministic synthetic parameters (PyTorch-like uniform fan-in init)."""
    ks = jax.random.split(key, 8)

    def lin(kw, kb, fan_in, fan_out):
        bound = 1.0 / jnp.sqrt(fan_in)
        w = jax.random.uniform(kw, (fan_in, fan_out), jnp.float32, -bound, bound)
        b = jax.random.uniform(kb, (1, fan_out), jnp.float32, -bound, bound)
        return w, b

    w1, b1 = lin(ks[0], ks[1], OBS_DIM, HIDDEN)
    w2, b2 = lin(ks[2], ks[3], HIDDEN, HIDDEN)
    wa, ba = lin(ks[4], ks[5], HIDDEN, ACT_DIM)
    wc, bc = lin(ks[6], ks[7], HIDDEN, 1)
    return dict(w1=w1, b1=b1, w2=w2, b2=b2, wa=wa, ba=ba, wc=wc, bc=bc)


def reference_forward(x, p):
    h1 = jnp.tanh(x @ p["w1"] + p["b1"])
    h2 = jnp.tanh(h1 @ p["w2"] + p["b2"])
    return h2 @ p["wa"] + p["ba"], h2 @ p["wc"] + p["bc"]


if __name__ == "__main__":
    key = jax.random.PRNGKey(0)
    kp, kx = jax.random.split(key)
    params = init_params(kp)
    packed = pack_params(params)

    # small inference-style batch (single-bucket path)
    B = 8
    x = jax.random.normal(kx, (B, OBS_DIM), jnp.float32)
    logits, value = jax.block_until_ready(actor_critic_forward(x, packed))
    ref_logits, ref_value = reference_forward(x, params)
    assert logits.shape == (B, ACT_DIM) and value.shape == (B, 1)
    assert jnp.allclose(logits, ref_logits, atol=1e-5, rtol=1e-5)
    assert jnp.allclose(value, ref_value, atol=1e-5, rtol=1e-5)

    # non-bucket-multiple rollout batch (single 2048 tile, padded rows sliced off)
    B2 = 1037
    x2 = jax.random.normal(kx, (B2, OBS_DIM), jnp.float32)
    l2, v2 = jax.block_until_ready(actor_critic_forward(x2, packed))
    rl2, rv2 = reference_forward(x2, params)
    assert l2.shape == (B2, ACT_DIM) and v2.shape == (B2, 1)
    assert jnp.allclose(l2, rl2, atol=1e-5, rtol=1e-5)
    assert jnp.allclose(v2, rv2, atol=1e-5, rtol=1e-5)

    # large rollout batch: exercises the multi-tile, even-grid path
    B3 = 4100
    x3 = jax.random.normal(kx, (B3, OBS_DIM), jnp.float32)
    l3, v3 = jax.block_until_ready(actor_critic_forward(x3, packed))
    rl3, rv3 = reference_forward(x3, params)
    assert l3.shape == (B3, ACT_DIM) and v3.shape == (B3, 1)
    assert jnp.allclose(l3, rl3, atol=1e-5, rtol=1e-5)
    assert jnp.allclose(v3, rv3, atol=1e-5, rtol=1e-5)

    print("KERNEL_OK")
</pallas_src>

<mosaic_0001>
module attributes {stable_mosaic.version = 11 : i64} {
  func.func @actor_critic_kernel(%arg0: i32, %arg1: memref<8x8xf32, #tpu.memory_space<vmem>>, %arg2: memref<8x128xf32, #tpu.memory_space<vmem>>, %arg3: memref<1x128xf32, #tpu.memory_space<vmem>>, %arg4: memref<128x128xf32, #tpu.memory_space<vmem>>, %arg5: memref<1x128xf32, #tpu.memory_space<vmem>>, %arg6: memref<128x8xf32, #tpu.memory_space<vmem>>, %arg7: memref<1x8xf32, #tpu.memory_space<vmem>>, %arg8: memref<8x8xf32, #tpu.memory_space<vmem>>) attributes {dimension_semantics = [#tpu.dimension_semantics<parallel>], iteration_bounds = array<i64: 1>, scalar_prefetch = 0 : i64, scratch_operands = 0 : i64, tpu.core_type = #tpu.core_type<tc>, window_params = [{transform_indices = @transform_0, window_bounds = array<i64: 8, 8>}, {pipeline_mode = #tpu.pipeline_mode<synchronous>, transform_indices = @transform_1, window_bounds = array<i64: 8, 128>}, {pipeline_mode = #tpu.pipeline_mode<synchronous>, transform_indices = @transform_2, window_bounds = array<i64: 1, 128>}, {pipeline_mode = #tpu.pipeline_mode<synchronous>, transform_indices = @transform_3, window_bounds = array<i64: 128, 128>}, {pipeline_mode = #tpu.pipeline_mode<synchronous>, transform_indices = @transform_4, window_bounds = array<i64: 1, 128>}, {pipeline_mode = #tpu.pipeline_mode<synchronous>, transform_indices = @transform_5, window_bounds = array<i64: 128, 8>}, {pipeline_mode = #tpu.pipeline_mode<synchronous>, transform_indices = @transform_6, window_bounds = array<i64: 1, 8>}, {transform_indices = @transform_7, window_bounds = array<i64: 8, 8>}]} {
    %c0 = arith.constant 0 : index
    %c0_0 = arith.constant 0 : index
    %0 = vector.load %arg1[%c0, %c0_0] : memref<8x8xf32, #tpu.memory_space<vmem>>, vector<8x8xf32>
    %c0_1 = arith.constant 0 : index
    %c0_2 = arith.constant 0 : index
    %1 = vector.load %arg2[%c0_1, %c0_2] : memref<8x128xf32, #tpu.memory_space<vmem>>, vector<8x128xf32>
    %cst = arith.constant dense<0.000000e+00> : vector<8x128xf32>
    %2 = tpu.matmul %0, %1, %cst {dimension_numbers = #tpu.dot_dimension_numbers<[1], [0], [0], [1], [0, 0, 1, 1], [], []>} : vector<8x8xf32>, vector<8x128xf32>, vector<8x128xf32> -> vector<8x128xf32>
    %c0_3 = arith.constant 0 : index
    %c0_4 = arith.constant 0 : index
    %3 = vector.load %arg3[%c0_3, %c0_4] : memref<1x128xf32, #tpu.memory_space<vmem>>, vector<1x128xf32>
    %4 = vector.broadcast %3 : vector<1x128xf32> to vector<8x128xf32>
    %5 = arith.addf %2, %4 : vector<8x128xf32>
    %6 = math.tanh %5 : vector<8x128xf32>
    %c0_5 = arith.constant 0 : index
    %c0_6 = arith.constant 0 : index
    %7 = vector.load %arg4[%c0_5, %c0_6] : memref<128x128xf32, #tpu.memory_space<vmem>>, vector<128x128xf32>
    %cst_7 = arith.constant dense<0.000000e+00> : vector<8x128xf32>
    %8 = tpu.matmul %6, %7, %cst_7 {dimension_numbers = #tpu.dot_dimension_numbers<[1], [0], [0], [1], [0, 0, 1, 1], [], []>} : vector<8x128xf32>, vector<128x128xf32>, vector<8x128xf32> -> vector<8x128xf32>
    %c0_8 = arith.constant 0 : index
    %c0_9 = arith.constant 0 : index
    %9 = vector.load %arg5[%c0_8, %c0_9] : memref<1x128xf32, #tpu.memory_space<vmem>>, vector<1x128xf32>
    %10 = vector.broadcast %9 : vector<1x128xf32> to vector<8x128xf32>
    %11 = arith.addf %8, %10 : vector<8x128xf32>
    %12 = math.tanh %11 : vector<8x128xf32>
    %c0_10 = arith.constant 0 : index
    %c0_11 = arith.constant 0 : index
    %13 = vector.load %arg6[%c0_10, %c0_11] : memref<128x8xf32, #tpu.memory_space<vmem>>, vector<128x8xf32>
    %cst_12 = arith.constant dense<0.000000e+00> : vector<8x8xf32>
    %14 = tpu.matmul %12, %13, %cst_12 {dimension_numbers = #tpu.dot_dimension_numbers<[1], [0], [0], [1], [0, 0, 1, 1], [], []>} : vector<8x128xf32>, vector<128x8xf32>, vector<8x8xf32> -> vector<8x8xf32>
    %c0_13 = arith.constant 0 : index
    %c0_14 = arith.constant 0 : index
    %15 = vector.load %arg7[%c0_13, %c0_14] : memref<1x8xf32, #tpu.memory_space<vmem>>, vector<1x8xf32>
    %16 = vector.broadcast %15 : vector<1x8xf32> to vector<8x8xf32>
    %17 = arith.addf %14, %16 : vector<8x8xf32>
    %c0_15 = arith.constant 0 : index
    %c0_16 = arith.constant 0 : index
    %18 = vector.load %arg8[%c0_15, %c0_16] : memref<8x8xf32, #tpu.memory_space<vmem>>, vector<8x8xf32>
    tpu.vector_store %arg8[%c0_15, %c0_16], %17 {strides = array<i32>} : memref<8x8xf32, #tpu.memory_space<vmem>>, vector<8x8xf32>,
    return
  }
  func.func @transform_0(%arg0: i32) -> (i32, i32) {
    %c0_i32 = arith.constant 0 : i32
    %c0_i32_0 = arith.constant 0 : i32
    return %arg0, %c0_i32 : i32, i32
  }
  func.func @transform_1(%arg0: i32) -> (i32, i32) {
    %c0_i32 = arith.constant 0 : i32
    %c0_i32_0 = arith.constant 0 : i32
    %c0_i32_1 = arith.constant 0 : i32
    return %c0_i32, %c0_i32_0 : i32, i32
  }
  func.func @transform_2(%arg0: i32) -> (i32, i32) {
    %c0_i32 = arith.constant 0 : i32
    %c0_i32_0 = arith.constant 0 : i32
    %c0_i32_1 = arith.constant 0 : i32
    return %c0_i32, %c0_i32_0 : i32, i32
  }
  func.func @transform_3(%arg0: i32) -> (i32, i32) {
    %c0_i32 = arith.constant 0 : i32
    %c0_i32_0 = arith.constant 0 : i32
    %c0_i32_1 = arith.constant 0 : i32
    return %c0_i32, %c0_i32_0 : i32, i32
  }
  func.func @transform_4(%arg0: i32) -> (i32, i32) {
    %c0_i32 = arith.constant 0 : i32
    %c0_i32_0 = arith.constant 0 : i32
    %c0_i32_1 = arith.constant 0 : i32
    return %c0_i32, %c0_i32_0 : i32, i32
  }
  func.func @transform_5(%arg0: i32) -> (i32, i32) {
    %c0_i32 = arith.constant 0 : i32
    %c0_i32_0 = arith.constant 0 : i32
    %c0_i32_1 = arith.constant 0 : i32
    return %c0_i32, %c0_i32_0 : i32, i32
  }
  func.func @transform_6(%arg0: i32) -> (i32, i32) {
    %c0_i32 = arith.constant 0 : i32
    %c0_i32_0 = arith.constant 0 : i32
    %c0_i32_1 = arith.constant 0 : i32
    return %c0_i32, %c0_i32_0 : i32, i32
  }
  func.func @transform_7(%arg0: i32) -> (i32, i32) {
    %c0_i32 = arith.constant 0 : i32
    %c0_i32_0 = arith.constant 0 : i32
    return %arg0, %c0_i32 : i32, i32
  }
}

</mosaic_0001>

<llo_original>
// kernel: _forward_padded.1
$region0: #{_forward_padded.1}
  #allocation0 [shape = 'u32[]', space=smem, size = 0x4, offset = 0x4, fixed_abs, tag = 'smem constant byte address 0x4 - core index']
  #allocation1 [shape = 'u32[72,128]{1,0:T(1,128)}', space=vmem, size = 0x9000, scoped, tag = 'internal scratch']
  %s0 = inlined_call_operand.vmem [shape: f32[8,8], index: 0, kind: input, shape index: {}]
  %s1 = inlined_call_operand.hbm [shape: f32[8,128], index: 1, kind: input, shape index: {}]
  %s2 = inlined_call_operand.vmem [shape: f32[1,128], index: 2, kind: input, shape index: {}]
  %s3 = inlined_call_operand.vmem [shape: f32[128,128], index: 3, kind: input, shape index: {}]
  %s4 = inlined_call_operand.vmem [shape: f32[1,128], index: 4, kind: input, shape index: {}]
  %s5 = inlined_call_operand.vmem [shape: f32[128,8], index: 5, kind: input, shape index: {}]
  %s6 = inlined_call_operand.vmem [shape: f32[1,8], index: 6, kind: input, shape index: {}]
  %s7 = inlined_call_operand.hbm [shape: f32[8,8], index: 7, kind: output, shape index: {}]
  %s8 = sld [smem:[#allocation0]]
  $region42: #{_forward_padded.1} parent=0
    _
  %s10 = ssub.s32 1, %s8
  %s11 = scalar_select 0, %s10, %s8
  $region1: #{_forward_padded.1} parent=0
    #allocation2 [shape = 'u8[4096]{0}', space=vmem, size = 0x1000, scoped, tag = 'input window, operand 1, single buffered']
    #allocation3 [shape = 's32[1]{0}', space=sflag, size = 0x4, scoped, tag = 'scoped memory for _forward_padded.1']
    #allocation4 [shape = 's32[1]{0}', space=sflag, size = 0x4, scoped, tag = 'scoped memory for _forward_padded.1']
    #allocation5 [shape = 'u8[4096]{0}', space=vmem, size = 0x1000, scoped, tag = 'output window, operand 0, single buffered']
    %12 = vsyncpa [#allocation3], 0
    %13 = vsyncpa [#allocation4], 0
    // Predicated region
    $region2: #{_forward_padded.1} parent=1 // pred_check
      _
    $region3: #{_forward_padded.1} parent=1 // pred_check_branch
      %15 = sbr.rel (0) target = $region5
    $region4: #{_forward_padded.1} parent=1 // pred_region
      _
    $region5: #{_forward_padded.1} parent=1 // pred_fallthru
      _
    // Predicated region
    $region6: #{_forward_padded.1} parent=1 // pred_check
      _
    $region7: #{_forward_padded.1} parent=1 // pred_check_branch
      %17 = sbr.rel (0) target = $region9
    $region8: #{_forward_padded.1} parent=1 // pred_region
      %19 = vsyncadd [#allocation3], 0
      %s21 = sshll.u32 %s1, 4
      %s22 = int_to_ptr.hbm [resolvable:$true] %s21
      %s23 = sshll.u32 [#allocation2], 4
      %s24 = int_to_ptr.vmem [resolvable:$true] %s23
      %26 = dma.hbm_to_vmem [thread:$0]  %s22, 128, %s24, [#allocation3]
    $region9: #{_forward_padded.1} parent=1 // pred_fallthru
      _
    // Predicated region
    $region10: #{_forward_padded.1} parent=1 // pred_check
      _
    $region11: #{_forward_padded.1} parent=1 // pred_check_branch
      %28 = sbr.rel (0) target = $region13
    $region12: #{_forward_padded.1} parent=1 // pred_region
      _
    $region13: #{_forward_padded.1} parent=1 // pred_fallthru
      _
    // Predicated region
    $region14: #{_forward_padded.1} parent=1 // pred_check
      _
    $region15: #{_forward_padded.1} parent=1 // pred_check_branch
      %30 = sbr.rel (0) target = $region17
    $region16: #{_forward_padded.1} parent=1 // pred_region
      _
    $region17: #{_forward_padded.1} parent=1 // pred_fallthru
      _
    // Predicated region
    $region18: #{_forward_padded.1} parent=1 // pred_check
      _
    $region19: #{_forward_padded.1} parent=1 // pred_check_branch
      %32 = sbr.rel (0) target = $region21
    $region20: #{_forward_padded.1} parent=1 // pred_region
      _
    $region21: #{_forward_padded.1} parent=1 // pred_fallthru
      _
    // Predicated region
    $region22: #{_forward_padded.1} parent=1 // pred_check
      _
    $region23: #{_forward_padded.1} parent=1 // pred_check_branch
      %34 = sbr.rel (0) target = $region25
    $region24: #{_forward_padded.1} parent=1 // pred_region
      _
    $region25: #{_forward_padded.1} parent=1 // pred_fallthru
      _
    // Predicated region
    $region26: #{_forward_padded.1} parent=1 // pred_check
      _
    $region27: #{_forward_padded.1} parent=1 // pred_check_branch
      %36 = sbr.rel (0) target = $region29
    $region28: #{_forward_padded.1} parent=1 // pred_region
      _
    $region29: #{_forward_padded.1} parent=1 // pred_fallthru
      _
    // Predicated region
    $region30: #{_forward_padded.1} parent=1 // pred_check
      _
    $region31: #{_forward_padded.1} parent=1 // pred_check_branch
      %38 = sbr.rel (0) target = $region33
    $region32: #{_forward_padded.1} parent=1 // pred_region
      %40 = dma.done [#allocation3], 128
    $region33: #{_forward_padded.1} parent=1 // pred_fallthru
      _
    %v41 = vld [vmem:[%s0] sm:$0xff]
    %v42 = vld [vmem:[#allocation2] sm:$0xff]
    %v43 = vld [vmem:[%s2] sm:$0x1]
    %v45 = vperm.slane %v43, 0
    %vm47 = vcmask 64512
    %v49 = vsel %vm47, %v41, 0
    %51 = vmatpush.msra.mxu0 0.0
    %52 = vmatpush.msra.mxu0 0.0
    %53 = vmatpush.msra.mxu0 0.0
    %54 = vmatpush.msra.mxu0 0.0
    %55 = vmatpush.msra.mxu0 0.0
    %56 = vmatpush.msra.mxu0 0.0
    %57 = vmatpush.msra.mxu0 0.0
    %58 = vmatpush.msra.mxu0 0.0
    %59 = vmatpush.msra.mxu0 0.0
    %60 = vmatpush.msra.mxu0 0.0
    %61 = vmatpush.msra.mxu0 0.0
    %62 = vmatpush.msra.mxu0 0.0
    %63 = vmatpush.msra.mxu0 0.0
    %64 = vmatpush.msra.mxu0 0.0
    %65 = vmatpush.msra.mxu0 0.0
    %66 = vmatpush.msra.mxu0 %v42
    %67 = vmatmul.f32.gmra.mxu0 %v49
    %v68 = vpop.f32.mrf.mxu0
    %v69 = vadd.f32 %v45, %v68
    %70 = vdwg.mxu0
    %v71 = vtanh.pop %v69
    %v72 = vld [vmem:[%s3] sm:$0xff]
    %v73 = vld [vmem:[%s3 + $0x8] sm:$0xff]
    %v74 = vld [vmem:[%s3 + $0x10] sm:$0xff]
    %v75 = vld [vmem:[%s3 + $0x18] sm:$0xff]
    %v76 = vld [vmem:[%s3 + $0x20] sm:$0xff]
    %v77 = vld [vmem:[%s3 + $0x28] sm:$0xff]
    %v78 = vld [vmem:[%s3 + $0x30] sm:$0xff]
    %v79 = vld [vmem:[%s3 + $0x38] sm:$0xff]
    %v80 = vld [vmem:[%s3 + $0x40] sm:$0xff]
    %v81 = vld [vmem:[%s3 + $0x48] sm:$0xff]
    %v82 = vld [vmem:[%s3 + $0x50] sm:$0xff]
    %v83 = vld [vmem:[%s3 + $0x58] sm:$0xff]
    %v84 = vld [vmem:[%s3 + $0x60] sm:$0xff]
    %v85 = vld [vmem:[%s3 + $0x68] sm:$0xff]
    %v86 = vld [vmem:[%s3 + $0x70] sm:$0xff]
    %v87 = vld [vmem:[%s3 + $0x78] sm:$0xff]
    %v88 = vld [vmem:[%s4] sm:$0x1]
    %v90 = vperm.slane %v88, 0
    %92 = vmatpush.msra.mxu0 %v87
    %93 = vmatpush.msra.mxu0 %v86
    %94 = vmatpush.msra.mxu0 %v85
    %95 = vmatpush.msra.mxu0 %v84
    %96 = vmatpush.msra.mxu0 %v83
    %97 = vmatpush.msra.mxu0 %v82
    %98 = vmatpush.msra.mxu0 %v81
    %99 = vmatpush.msra.mxu0 %v80
    %100 = vmatpush.msra.mxu0 %v79
    %101 = vmatpush.msra.mxu0 %v78
    %102 = vmatpush.msra.mxu0 %v77
    %103 = vmatpush.msra.mxu0 %v76
    %104 = vmatpush.msra.mxu0 %v75
    %105 = vmatpush.msra.mxu0 %v74
    %106 = vmatpush.msra.mxu0 %v73
    %107 = vmatpush.msra.mxu0 %v72
    %108 = vmatmul.f32.gmra.mxu0 %v71
    %v109 = vpop.f32.mrf.mxu0
    %v110 = vadd.f32 %v90, %v109
    %111 = vdwg.mxu0
    %v112 = vtanh.pop %v110
    %v113 = vld [vmem:[%s5] sm:$0xff]
    %v114 = vld [vmem:[%s5 + $0x8] sm:$0xff]
    %v115 = vld [vmem:[%s5 + $0x10] sm:$0xff]
    %v116 = vld [vmem:[%s5 + $0x18] sm:$0xff]
    %v117 = vld [vmem:[%s5 + $0x20] sm:$0xff]
    %v118 = vld [vmem:[%s5 + $0x28] sm:$0xff]
    %v119 = vld [vmem:[%s5 + $0x30] sm:$0xff]
    %v120 = vld [vmem:[%s5 + $0x38] sm:$0xff]
    %v121 = vld [vmem:[%s5 + $0x40] sm:$0xff]
    %v122 = vld [vmem:[%s5 + $0x48] sm:$0xff]
    %v123 = vld [vmem:[%s5 + $0x50] sm:$0xff]
    %v124 = vld [vmem:[%s5 + $0x58] sm:$0xff]
    %v125 = vld [vmem:[%s5 + $0x60] sm:$0xff]
    %v126 = vld [vmem:[%s5 + $0x68] sm:$0xff]
    %v127 = vld [vmem:[%s5 + $0x70] sm:$0xff]
    %v128 = vld [vmem:[%s5 + $0x78] sm:$0xff]
    %v129 = vld [vmem:[%s6] sm:$0x1]
    %v131 = vperm.slane %v129, 0
    %133 = vmatpush.msra.mxu0 %v128
    %134 = vmatpush.msra.mxu0 %v127
    %135 = vmatpush.msra.mxu0 %v126
    %136 = vmatpush.msra.mxu0 %v125
    %137 = vmatpush.msra.mxu0 %v124
    %138 = vmatpush.msra.mxu0 %v123
    %139 = vmatpush.msra.mxu0 %v122
    %140 = vmatpush.msra.mxu0 %v121
    %141 = vmatpush.msra.mxu0 %v120
    %142 = vmatpush.msra.mxu0 %v119
    %143 = vmatpush.msra.mxu0 %v118
    %144 = vmatpush.msra.mxu0 %v117
    %145 = vmatpush.msra.mxu0 %v116
    %146 = vmatpush.msra.mxu0 %v115
    %147 = vmatpush.msra.mxu0 %v114
    %148 = vmatpush.msra.mxu0 %v113
    %149 = vmatmul.f32.gmra.mxu0 %v112
    %v150 = vpop.f32.mrf.mxu0
    %v151 = vadd.f32 %v131, %v150
    %152 = vdwg.mxu0
    %153 = vst.msk [vmem:[#allocation5] sm:$0xff] %vm47, %v151
    // Predicated region
    $region34: #{_forward_padded.1} parent=1 // pred_check
      _
    $region35: #{_forward_padded.1} parent=1 // pred_check_branch
      %155 = sbr.rel (0) target = $region37
    $region36: #{_forward_padded.1} parent=1 // pred_region
      %157 = vsyncadd [#allocation4], 0
      %s159 = sshll.u32 [#allocation5], 4
      %s160 = int_to_ptr.vmem [resolvable:$true] %s159
      %s161 = sshll.u32 %s7, 4
      %s162 = int_to_ptr.hbm [resolvable:$true] %s161
      %164 = dma.vmem_to_hbm [thread:$0]  %s160, 128, %s162, [#allocation4]
    $region37: #{_forward_padded.1} parent=1 // pred_fallthru
      _
    // Predicated region
    $region38: #{_forward_padded.1} parent=1 // pred_check
      _
    $region39: #{_forward_padded.1} parent=1 // pred_check_branch
      %166 = sbr.rel (0) target = $region41
    $region40: #{_forward_padded.1} parent=1 // pred_region
      %168 = dma.done [#allocation4], 128
    $region41: #{_forward_padded.1} parent=1 // pred_fallthru
      _
    %169 = vsyncpa [#allocation3], 1
    %170 = vsyncpa [#allocation4], 1

</llo_original>
